<compile_context>
chip_gen: v6e
topology: v6e:2x2x1
jax: 0.10.0
libtpu: 0.0.40
codegen_flags: <defaults>
</compile_context>

<pallas_src>
import functools
import math

import jax
import jax.numpy as jnp
from jax.experimental import pallas as pl
from jax.experimental.pallas import tpu as pltpu

_MIB = 1024 * 1024
# v7x physical VMEM is 64 MiB (v5e/v6e: 128 MiB); capping the scoped limit at
# 64 MiB keeps the request valid on every generation.
_VMEM_CAP = 64 * _MIB

# On v7x (2 TensorCores / chip) flip this to pltpu.CORE_PARALLEL so the batch
# grid axis is explicitly sharded across both cores; plain PARALLEL is the
# portable default for single-core chips.
_BATCH_DIM_SEMANTICS = pltpu.PARALLEL


def _vmem_limit(nbytes):
    return int(min(max(int(nbytes) + 4 * _MIB, 16 * _MIB), _VMEM_CAP))


# ----------------------------------------------------------------------------
# Kernel 1: PointCN + fused score projection.
#   y      = x + Conv(ReLU(BN(IN(Conv(ReLU(BN(IN(x))))))))
#   scores = sigmoid(w_p^T x + b_p)   (Linear on x^T of the RAW x; Dropout(0)=id)
# pvec packs [s1, t1, b1, s2, t2, b2, w_p, b_p] as columns of a (C, 8) array.
# x / y are streamed bf16; all norm math in f32; matmul operands bf16.
# ----------------------------------------------------------------------------
def _pointcn_score_kernel(x_ref, w1_ref, w2_ref, pvec_ref, y_ref, s_ref):
    f32 = jnp.float32
    bf16 = jnp.bfloat16
    x = x_ref[0].astype(f32)                   # (C, N) bf16 -> f32 for norm math
    pv = pvec_ref[...]                         # (C, 8) f32
    s1, t1, b1 = pv[:, 0:1], pv[:, 1:2], pv[:, 2:3]
    s2, t2, b2 = pv[:, 3:4], pv[:, 4:5], pv[:, 5:6]
    wp, bp = pv[:, 6:7], pv[0:1, 7:8]
    eps = 1e-3                                 # InstanceNorm1d(eps=0.001) per spec

    # fused score projection on the RAW x tile (matches Pool.forward)
    s_ref[0] = jax.nn.sigmoid(jnp.sum(x * wp, axis=0, keepdims=True) + bp
                              ).astype(s_ref.dtype)

    # IN -> BN(eval) -> ReLU -> Conv1x1
    mean = jnp.mean(x, axis=1, keepdims=True)
    var = jnp.maximum(jnp.mean(x * x, axis=1, keepdims=True) - mean * mean, 0.0)
    h = (x - mean) * jax.lax.rsqrt(var + eps)
    h = jnp.maximum(h * s1 + t1, 0.0)
    h = jnp.dot(w1_ref[...], h.astype(bf16), preferred_element_type=f32) + b1

    # IN -> BN(eval) -> ReLU -> Conv1x1
    mean = jnp.mean(h, axis=1, keepdims=True)
    var = jnp.maximum(jnp.mean(h * h, axis=1, keepdims=True) - mean * mean, 0.0)
    h = (h - mean) * jax.lax.rsqrt(var + eps)
    h = jnp.maximum(h * s2 + t2, 0.0)
    h = jnp.dot(w2_ref[...], h.astype(bf16), preferred_element_type=f32) + b2

    y_ref[0] = (h + x).astype(y_ref.dtype)     # residual (no shot_cut); bf16 out


def pointcn_and_score(x_bf16, p):
    B, C, N = x_bf16.shape
    full = lambda shape: pl.BlockSpec(shape, lambda b: (0, 0))
    # double-buffered blocks (x, y bf16; scores f32; weights) + f32 temporaries
    est = 2 * (C * N * 2 + C * N * 2 + N * 4 + 2 * C * C * 2 + C * 8 * 4) \
        + 4 * C * N * 4
    # TODO(synk): for very large N on v7x a two-pass (stats + apply) InstanceNorm
    # would allow tiling N; bf16 streaming keeps realistic N within 64 MiB here.
    y, s = pl.pallas_call(
        _pointcn_score_kernel,
        out_shape=(jax.ShapeDtypeStruct((B, C, N), jnp.bfloat16),
                   jax.ShapeDtypeStruct((B, 1, N), jnp.float32)),
        grid=(B,),
        in_specs=[pl.BlockSpec((1, C, N), lambda b: (b, 0, 0)),
                  full((C, C)), full((C, C)), full((C, 8))],
        out_specs=(pl.BlockSpec((1, C, N), lambda b: (b, 0, 0)),
                   pl.BlockSpec((1, 1, N), lambda b: (b, 0, 0))),
        compiler_params=pltpu.CompilerParams(
            dimension_semantics=(_BATCH_DIM_SEMANTICS,),
            vmem_limit_bytes=_vmem_limit(est)),
    )(x_bf16, p["pc_w1"], p["pc_w2"], p["pc_vec"])
    return y, s[:, 0, :]                       # (B,C,N) bf16, (B,N) f32


# ----------------------------------------------------------------------------
# Kernel 2: AttentionPropagation, tiled over the key dim with online softmax.
#   motion1 = x_sel * values (scaling folded in, cached once), motion2 = x.
# Grid: (B, N//tkv) with the key-chunk (reduction) axis last; per-batch running
# max / denom / accumulator + cached scaled-motion1 live in VMEM scratch.
# Heads handled by one batched dot_general (scores laid out (head, tkv, ns):
# keys on sublanes, queries on lanes so softmax stats broadcast w/o transpose).
# avec packs [bq, bkv, bmh, bc1, sbn, tbn, bc2] as columns of a (2C, 7) array.
# ----------------------------------------------------------------------------
def _attn_kernel(head, head_dim, head_dtype,
                 m1_ref, vals_ref, m2_ref,
                 wq_ref, wkv_ref, wmh_ref, wc1a_ref, wc1b_ref, wc2_ref,
                 avec_ref, o_ref,
                 m1s_sc, q_sc, m_sc, l_sc, acc_sc):
    f32 = jnp.float32
    bf16 = jnp.bfloat16
    C = head * head_dim
    kv = pl.program_id(1)

    av_cols = avec_ref[...]                    # (2C, 7) f32
    bq = av_cols[0:C, 0:1]
    bkv = av_cols[:, 1:2]
    bmh = av_cols[0:C, 2:3]
    bc1 = av_cols[:, 3:4]
    sbn = av_cols[:, 4:5]
    tbn = av_cols[:, 5:6]
    bc2 = av_cols[0:C, 6:7]

    @pl.when(kv == 0)
    def _():
        # scaled motion1 computed ONCE per batch, cached for q / cat / residual
        m1s = (m1_ref[0].astype(f32) * vals_ref[0]).astype(bf16)     # (C, ns)
        m1s_sc[...] = m1s
        q = jnp.dot(wq_ref[...], m1s, preferred_element_type=f32) + bq
        q_sc[...] = q.reshape(head, head_dim, -1).astype(head_dtype)
        m_sc[...] = jnp.full_like(m_sc, -jnp.inf)
        l_sc[...] = jnp.zeros_like(l_sc)
        acc_sc[...] = jnp.zeros_like(acc_sc)

    # K/V projection for this key chunk (stacked (2C, C) weight -> one MXU dot)
    m2c = m2_ref[0]                            # (C, tkv) bf16
    kvp = jnp.dot(wkv_ref[...], m2c, preferred_element_type=f32) + bkv   # (2C, tkv)
    kh = kvp[0:C, :].astype(head_dtype).reshape(head, head_dim, -1)      # (h, hd, tkv)
    vh = kvp[C:2 * C, :].astype(head_dtype).reshape(head, head_dim, -1)

    inv_sqrt_d = 1.0 / (head_dim ** 0.5)
    # s[h, m, n] = sum_d k[h, d, m] * q[h, d, n] / sqrt(hd)
    s = jax.lax.dot_general(kh, q_sc[...], (((1,), (1,)), ((0,), (0,))),
                            preferred_element_type=f32) * inv_sqrt_d     # (h, tkv, ns)

    m_prev = m_sc[...]                                                   # (h, 1, ns)
    m_new = jnp.maximum(m_prev, jnp.max(s, axis=1, keepdims=True))
    alpha = jnp.exp(m_prev - m_new)
    p_attn = jnp.exp(s - m_new)
    l_sc[...] = alpha * l_sc[...] + jnp.sum(p_attn, axis=1, keepdims=True)
    # acc[h, d, n] += sum_m v[h, d, m] * p[h, m, n]
    acc_sc[...] = alpha * acc_sc[...] + jax.lax.dot_general(
        vh, p_attn.astype(head_dtype), (((2,), (1,)), ((0,), (0,))),
        preferred_element_type=f32)
    m_sc[...] = m_new

    @pl.when(kv == pl.num_programs(1) - 1)
    def _():
        av = acc_sc[...] * pl.reciprocal(l_sc[...], approx=True)   # (h, hd, ns)
        av = av.reshape(C, -1)                                     # (C, ns)
        mh = jnp.dot(wmh_ref[...], av.astype(bf16), preferred_element_type=f32) + bmh
        m1s = m1s_sc[...]                                          # cached bf16
        # cat_filter([m1s; mh]) without materializing the concat (wc1 split)
        hcat = (jnp.dot(wc1a_ref[...], m1s, preferred_element_type=f32)
                + jnp.dot(wc1b_ref[...], mh.astype(bf16), preferred_element_type=f32)
                + bc1)
        hcat = jnp.maximum(hcat * sbn + tbn, 0.0)                  # BN(eval)+ReLU
        out = jnp.dot(wc2_ref[...], hcat.astype(bf16), preferred_element_type=f32) + bc2
        o_ref[0] = (m1s.astype(f32) + out).astype(o_ref.dtype)


def _attn_vmem_bytes(C, ns, tkv, head, hd_bytes):
    # double-buffered blocks: m1 bf16, vals f32, m2 bf16, out f32
    blocks = 2 * (C * ns * 2 + ns * 4 + C * tkv * 2 + C * ns * 4)
    weights = 2 * (10 * C * C * 2 + 2 * C * 7 * 4)
    scratch = C * ns * 2 + C * ns * hd_bytes + 2 * head * ns * 4 + C * ns * 4
    temps = 2 * head * tkv * ns * 4 + 2 * (2 * C) * tkv * 4       # s/p_attn, kvp
    return blocks + weights + scratch + temps


def attention_prop(m1, vals, m2, p, head, tkv=None):
    B, C, ns = m1.shape
    _, _, N = m2.shape
    head_dim = C // head
    # bf16 packs 16 rows per sublane group: with head_dim < 16 the
    # (C,.) -> (head, head_dim, .) reshape would relayout every kv step, so keep
    # head-shaped tensors f32 for small heads (kernel is bandwidth-bound anyway).
    head_dtype = jnp.bfloat16 if head_dim >= 16 else jnp.float32
    hd_bytes = 2 if head_dtype == jnp.bfloat16 else 4

    if tkv is None:
        # Prefer the LARGEST key chunk that keeps the working set under ~40 MiB:
        # fewer grid steps (0.35 us each) and longer MXU ops.
        budget = 40 * _MIB
        cands = [c for c in (N, 8192, 4096, 2048, 1024, 512, 256, 128)
                 if c <= N and N % c == 0]
        tkv = cands[-1]
        for c in cands:
            if _attn_vmem_bytes(C, ns, c, head, hd_bytes) <= budget:
                tkv = c
                break
    assert N % tkv == 0, (N, tkv)
    n_kv = N // tkv
    est = _attn_vmem_bytes(C, ns, tkv, head, hd_bytes)

    full = lambda shape: pl.BlockSpec(shape, lambda b, k: (0, 0))
    kern = functools.partial(_attn_kernel, head, head_dim, head_dtype)
    # TODO(synk): on v7x at very large ns, additionally tile ns (query dim) or
    # single-buffer the kv-invariant blocks to stay within its 64 MiB VMEM.
    return pl.pallas_call(
        kern,
        out_shape=jax.ShapeDtypeStruct((B, C, ns), jnp.float32),
        grid=(B, n_kv),
        in_specs=[pl.BlockSpec((1, C, ns), lambda b, k: (b, 0, 0)),
                  pl.BlockSpec((1, 1, ns), lambda b, k: (b, 0, 0)),
                  pl.BlockSpec((1, C, tkv), lambda b, k: (b, 0, k)),
                  full((C, C)), full((2 * C, C)), full((C, C)),
                  full((2 * C, C)), full((2 * C, C)), full((C, 2 * C)),
                  full((2 * C, 7))],
        out_specs=pl.BlockSpec((1, C, ns), lambda b, k: (b, 0, 0)),
        scratch_shapes=[pltpu.VMEM((C, ns), jnp.bfloat16),             # m1 * values
                        pltpu.VMEM((head, head_dim, ns), head_dtype),  # q
                        pltpu.VMEM((head, 1, ns), jnp.float32),        # running max
                        pltpu.VMEM((head, 1, ns), jnp.float32),        # running denom
                        pltpu.VMEM((head, head_dim, ns), jnp.float32)],  # acc
        compiler_params=pltpu.CompilerParams(
            dimension_semantics=(_BATCH_DIM_SEMANTICS, pltpu.ARBITRARY),
            vmem_limit_bytes=_vmem_limit(est)),
    )(m1, vals, m2, p["wq"], p["wkv"], p["wmh"],
      p["wc1a"], p["wc1b"], p["wc2"], p["avec"])


# ----------------------------------------------------------------------------
# Parameter init (deterministic, PyTorch-like uniform fan-in init; BN folded to
# eval-mode affine). Matmul weights stored in bf16; vector params packed.
# ----------------------------------------------------------------------------
def init_params(key, channels, head):
    C = channels
    bf16 = jnp.bfloat16

    def conv(k, cout, cin):
        kw, kb = jax.random.split(k)
        bound = 1.0 / math.sqrt(cin)
        w = jax.random.uniform(kw, (cout, cin), jnp.float32, -bound, bound)
        b = jax.random.uniform(kb, (cout, 1), jnp.float32, -bound, bound)
        return w, b

    def bn_affine(k, c, eps=1e-5):
        kg, kb = jax.random.split(k)
        gamma = 1.0 + 0.1 * jax.random.normal(kg, (c, 1), jnp.float32)
        beta = 0.05 * jax.random.normal(kb, (c, 1), jnp.float32)
        rm = jnp.zeros((c, 1), jnp.float32)
        rv = jnp.ones((c, 1), jnp.float32)
        scale = gamma * jax.lax.rsqrt(rv + eps)
        shift = beta - rm * scale
        return scale, shift

    ks = jax.random.split(key, 12)
    p = {}

    # PointCN + score projection
    w1, b1 = conv(ks[0], C, C)
    w2, b2 = conv(ks[1], C, C)
    s1, t1 = bn_affine(ks[2], C)
    s2, t2 = bn_affine(ks[3], C)
    wp, bp = conv(ks[4], 1, C)                      # Linear(C, 1): wp (1,C), bp (1,1)
    p["pc_w1"] = w1.astype(bf16)
    p["pc_w2"] = w2.astype(bf16)
    p["pc_vec"] = jnp.concatenate(
        [s1, t1, b1, s2, t2, b2, wp.T, jnp.broadcast_to(bp, (C, 1))], axis=1)  # (C, 8)

    # AttentionPropagation
    wq, bq = conv(ks[5], C, C)
    wk, bk = conv(ks[6], C, C)
    wv, bv = conv(ks[7], C, C)
    wmh, bmh = conv(ks[8], C, C)
    wc1, bc1 = conv(ks[9], 2 * C, 2 * C)
    sbn, tbn = bn_affine(ks[10], 2 * C)
    wc2, bc2 = conv(ks[11], C, 2 * C)
    p["wq"] = wq.astype(bf16)
    p["wkv"] = jnp.concatenate([wk, wv], axis=0).astype(bf16)      # (2C, C) stacked
    p["wmh"] = wmh.astype(bf16)
    p["wc1a"] = wc1[:, :C].astype(bf16)                            # applied to motion1
    p["wc1b"] = wc1[:, C:].astype(bf16)                            # applied to add_value
    p["wc2"] = wc2.astype(bf16)
    z = jnp.zeros((C, 1), jnp.float32)
    p["avec"] = jnp.concatenate(
        [jnp.concatenate([bq, z], axis=0),
         jnp.concatenate([bk, bv], axis=0),
         jnp.concatenate([bmh, z], axis=0),
         bc1, sbn, tbn,
         jnp.concatenate([bc2, z], axis=0)], axis=1)               # (2C, 7)
    return p


# ----------------------------------------------------------------------------
# Pool.forward
# ----------------------------------------------------------------------------
def pool_forward(x, params, head, k_ratio, tkv=None):
    B, C, N = x.shape
    # Big tensors streamed bf16 (pipeline is HBM-bandwidth bound for C <= 128);
    # all norm / softmax math stays f32 inside the kernels.
    x_bf16 = x.astype(jnp.bfloat16)
    # scores = sigmoid(proj(x^T)) fused with init_filter(x) in one kernel
    x_pcn, scores = pointcn_and_score(x_bf16, params)            # (B,C,N) bf16, (B,N)
    ns = int(k_ratio * N)
    # TODO(synk): top-k selection + column (lane-dim) gather stay in XLA; folding
    # the gather into the attention kernel via scalar-prefetched indices has no
    # efficient Pallas TPU form (points live on lanes -> per-column DMA gather).
    values, idx = jax.lax.top_k(scores, ns)                      # (B, ns)
    idx_g = jnp.broadcast_to(idx[:, None, :], (B, C, ns))
    x_sel = jnp.take_along_axis(x_pcn, idx_g, axis=2)            # (B, C, ns) bf16
    # top-k value scaling (x_sel * values) is folded into the attention kernel;
    # motion2 is the ORIGINAL x (per PyTorch forward), already bf16.
    return attention_prop(x_sel, values[:, None, :], x_bf16,
                          params, head, tkv=tkv)                 # (B, C, ns) f32


if __name__ == "__main__":
    B, C, N = 2, 32, 256
    head, k_ratio = 4, 0.5

    key = jax.random.PRNGKey(0)
    kx, kp = jax.random.split(key)
    x = jax.random.normal(kx, (B, C, N), jnp.float32)
    params = init_params(kp, C, head)

    # tkv=128 -> 2 key chunks: exercises the online-softmax tiling path.
    out = pool_forward(x, params, head, k_ratio, tkv=128)
    out = jax.block_until_ready(out)

    ns = int(k_ratio * N)
    assert out.shape == (B, C, ns), out.shape
    assert out.dtype == jnp.float32
    assert bool(jnp.all(jnp.isfinite(out)))

    # Default tkv auto-selection (single key chunk here) must also run clean.
    out_full = jax.block_until_ready(pool_forward(x, params, head, k_ratio))
    assert out_full.shape == (B, C, ns)
    assert bool(jnp.all(jnp.isfinite(out_full)))
    print("KERNEL_OK")
</pallas_src>

<mosaic_0001>
module attributes {stable_mosaic.version = 11 : i64} {
  func.func @_pointcn_score_kernel(%arg0: i32, %arg1: memref<1x32x256xbf16, #tpu.memory_space<vmem>>, %arg2: memref<32x32xbf16, #tpu.memory_space<vmem>>, %arg3: memref<32x32xbf16, #tpu.memory_space<vmem>>, %arg4: memref<32x8xf32, #tpu.memory_space<vmem>>, %arg5: memref<1x32x256xbf16, #tpu.memory_space<vmem>>, %arg6: memref<1x1x256xf32, #tpu.memory_space<vmem>>) attributes {dimension_semantics = [#tpu.dimension_semantics<parallel>], iteration_bounds = array<i64: 2>, scalar_prefetch = 0 : i64, scratch_operands = 0 : i64, tpu.core_type = #tpu.core_type<tc>, window_params = [{transform_indices = @transform_0, window_bounds = array<i64: 1, 32, 256>}, {pipeline_mode = #tpu.pipeline_mode<synchronous>, transform_indices = @transform_1, window_bounds = array<i64: 32, 32>}, {pipeline_mode = #tpu.pipeline_mode<synchronous>, transform_indices = @transform_2, window_bounds = array<i64: 32, 32>}, {pipeline_mode = #tpu.pipeline_mode<synchronous>, transform_indices = @transform_3, window_bounds = array<i64: 32, 8>}, {transform_indices = @transform_4, window_bounds = array<i64: 1, 32, 256>}, {transform_indices = @transform_5, window_bounds = array<i64: 1, 1, 256>}]} {
    %c0 = arith.constant 0 : index
    %c0_0 = arith.constant 0 : index
    %c0_1 = arith.constant 0 : index
    %0 = vector.load %arg1[%c0, %c0_0, %c0_1] : memref<1x32x256xbf16, #tpu.memory_space<vmem>>, vector<1x32x256xbf16>
    %1 = vector.shape_cast %0 : vector<1x32x256xbf16> to vector<32x256xbf16>
    %2 = arith.extf %1 : vector<32x256xbf16> to vector<32x256xf32>
    %c0_2 = arith.constant 0 : index
    %c0_3 = arith.constant 0 : index
    %3 = vector.load %arg4[%c0_2, %c0_3] : memref<32x8xf32, #tpu.memory_space<vmem>>, vector<32x8xf32>
    %4 = vector.extract_strided_slice %3 {offsets = [0, 0], sizes = [32, 1], strides = [1, 1]} : vector<32x8xf32> to vector<32x1xf32>
    %5 = vector.extract_strided_slice %3 {offsets = [0, 1], sizes = [32, 1], strides = [1, 1]} : vector<32x8xf32> to vector<32x1xf32>
    %6 = vector.extract_strided_slice %3 {offsets = [0, 2], sizes = [32, 1], strides = [1, 1]} : vector<32x8xf32> to vector<32x1xf32>
    %7 = vector.extract_strided_slice %3 {offsets = [0, 3], sizes = [32, 1], strides = [1, 1]} : vector<32x8xf32> to vector<32x1xf32>
    %8 = vector.extract_strided_slice %3 {offsets = [0, 4], sizes = [32, 1], strides = [1, 1]} : vector<32x8xf32> to vector<32x1xf32>
    %9 = vector.extract_strided_slice %3 {offsets = [0, 5], sizes = [32, 1], strides = [1, 1]} : vector<32x8xf32> to vector<32x1xf32>
    %10 = vector.extract_strided_slice %3 {offsets = [0, 6], sizes = [32, 1], strides = [1, 1]} : vector<32x8xf32> to vector<32x1xf32>
    %11 = vector.extract_strided_slice %3 {offsets = [0, 7], sizes = [1, 1], strides = [1, 1]} : vector<32x8xf32> to vector<1x1xf32>
    %12 = vector.broadcast %10 : vector<32x1xf32> to vector<32x256xf32>
    %13 = arith.mulf %2, %12 : vector<32x256xf32>
    %cst = arith.constant dense<0.000000e+00> : vector<256xf32>
    %14 = vector.multi_reduction <add>, %13, %cst [0] : vector<32x256xf32> to vector<256xf32>
    %15 = vector.shape_cast %14 : vector<256xf32> to vector<1x256xf32>
    %16 = vector.broadcast %11 : vector<1x1xf32> to vector<1x256xf32>
    %17 = arith.addf %15, %16 : vector<1x256xf32>
    %18 = arith.negf %17 : vector<1x256xf32>
    %19 = math.exp %18 : vector<1x256xf32>
    %cst_4 = arith.constant 1.000000e+00 : f32
    %20 = vector.broadcast %cst_4 : f32 to vector<1x256xf32>
    %21 = arith.addf %20, %19 : vector<1x256xf32>
    %22 = arith.divf %20, %21 : vector<1x256xf32>
    %c0_5 = arith.constant 0 : index
    %c0_6 = arith.constant 0 : index
    %c0_7 = arith.constant 0 : index
    %23 = vector.load %arg6[%c0_5, %c0_6, %c0_7] : memref<1x1x256xf32, #tpu.memory_space<vmem>>, vector<1x1x256xf32>
    %24 = vector.shape_cast %23 : vector<1x1x256xf32> to vector<1x256xf32>
    %25 = vector.shape_cast %22 : vector<1x256xf32> to vector<1x1x256xf32>
    tpu.vector_store %arg6[%c0_5, %c0_6, %c0_7], %25 {strides = array<i32>} : memref<1x1x256xf32, #tpu.memory_space<vmem>>, vector<1x1x256xf32>,
    %cst_8 = arith.constant dense<0.000000e+00> : vector<32xf32>
    %26 = vector.multi_reduction <add>, %2, %cst_8 [1] : vector<32x256xf32> to vector<32xf32>
    %27 = vector.shape_cast %26 : vector<32xf32> to vector<32x1xf32>
    %cst_9 = arith.constant 2.560000e+02 : f32
    %28 = vector.broadcast %cst_9 : f32 to vector<32x1xf32>
    %29 = arith.divf %27, %28 : vector<32x1xf32>
    %30 = arith.mulf %2, %2 : vector<32x256xf32>
    %cst_10 = arith.constant dense<0.000000e+00> : vector<32xf32>
    %31 = vector.multi_reduction <add>, %30, %cst_10 [1] : vector<32x256xf32> to vector<32xf32>
    %32 = vector.shape_cast %31 : vector<32xf32> to vector<32x1xf32>
    %cst_11 = arith.constant 2.560000e+02 : f32
    %33 = vector.broadcast %cst_11 : f32 to vector<32x1xf32>
    %34 = arith.divf %32, %33 : vector<32x1xf32>
    %35 = arith.mulf %29, %29 : vector<32x1xf32>
    %36 = arith.subf %34, %35 : vector<32x1xf32>
    %cst_12 = arith.constant 0.000000e+00 : f32
    %37 = vector.broadcast %cst_12 : f32 to vector<32x1xf32>
    %38 = arith.maximumf %36, %37 : vector<32x1xf32>
    %39 = vector.broadcast %29 : vector<32x1xf32> to vector<32x256xf32>
    %40 = arith.subf %2, %39 : vector<32x256xf32>
    %cst_13 = arith.constant 1.000000e-03 : f32
    %41 = vector.broadcast %cst_13 : f32 to vector<32x1xf32>
    %42 = arith.addf %38, %41 : vector<32x1xf32>
    %43 = math.rsqrt %42 : vector<32x1xf32>
    %44 = vector.broadcast %43 : vector<32x1xf32> to vector<32x256xf32>
    %45 = arith.mulf %40, %44 : vector<32x256xf32>
    %46 = vector.broadcast %4 : vector<32x1xf32> to vector<32x256xf32>
    %47 = arith.mulf %45, %46 : vector<32x256xf32>
    %48 = vector.broadcast %5 : vector<32x1xf32> to vector<32x256xf32>
    %49 = arith.addf %47, %48 : vector<32x256xf32>
    %cst_14 = arith.constant 0.000000e+00 : f32
    %50 = vector.broadcast %cst_14 : f32 to vector<32x256xf32>
    %51 = arith.maximumf %49, %50 : vector<32x256xf32>
    %c0_15 = arith.constant 0 : index
    %c0_16 = arith.constant 0 : index
    %52 = vector.load %arg2[%c0_15, %c0_16] : memref<32x32xbf16, #tpu.memory_space<vmem>>, vector<32x32xbf16>
    %53 = arith.truncf %51 : vector<32x256xf32> to vector<32x256xbf16>
    %cst_17 = arith.constant dense<0.000000e+00> : vector<32x256xf32>
    %54 = tpu.matmul %52, %53, %cst_17 {dimension_numbers = #tpu.dot_dimension_numbers<[1], [0], [0], [1], [0, 0, 1, 1], [], []>} : vector<32x32xbf16>, vector<32x256xbf16>, vector<32x256xf32> -> vector<32x256xf32>
    %55 = vector.broadcast %6 : vector<32x1xf32> to vector<32x256xf32>
    %56 = arith.addf %54, %55 : vector<32x256xf32>
    %cst_18 = arith.constant dense<0.000000e+00> : vector<32xf32>
    %57 = vector.multi_reduction <add>, %56, %cst_18 [1] : vector<32x256xf32> to vector<32xf32>
    %58 = vector.shape_cast %57 : vector<32xf32> to vector<32x1xf32>
    %cst_19 = arith.constant 2.560000e+02 : f32
    %59 = vector.broadcast %cst_19 : f32 to vector<32x1xf32>
    %60 = arith.divf %58, %59 : vector<32x1xf32>
    %61 = arith.mulf %56, %56 : vector<32x256xf32>
    %cst_20 = arith.constant dense<0.000000e+00> : vector<32xf32>
    %62 = vector.multi_reduction <add>, %61, %cst_20 [1] : vector<32x256xf32> to vector<32xf32>
    %63 = vector.shape_cast %62 : vector<32xf32> to vector<32x1xf32>
    %cst_21 = arith.constant 2.560000e+02 : f32
    %64 = vector.broadcast %cst_21 : f32 to vector<32x1xf32>
    %65 = arith.divf %63, %64 : vector<32x1xf32>
    %66 = arith.mulf %60, %60 : vector<32x1xf32>
    %67 = arith.subf %65, %66 : vector<32x1xf32>
    %cst_22 = arith.constant 0.000000e+00 : f32
    %68 = vector.broadcast %cst_22 : f32 to vector<32x1xf32>
    %69 = arith.maximumf %67, %68 : vector<32x1xf32>
    %70 = vector.broadcast %60 : vector<32x1xf32> to vector<32x256xf32>
    %71 = arith.subf %56, %70 : vector<32x256xf32>
    %cst_23 = arith.constant 1.000000e-03 : f32
    %72 = vector.broadcast %cst_23 : f32 to vector<32x1xf32>
    %73 = arith.addf %69, %72 : vector<32x1xf32>
    %74 = math.rsqrt %73 : vector<32x1xf32>
    %75 = vector.broadcast %74 : vector<32x1xf32> to vector<32x256xf32>
    %76 = arith.mulf %71, %75 : vector<32x256xf32>
    %77 = vector.broadcast %7 : vector<32x1xf32> to vector<32x256xf32>
    %78 = arith.mulf %76, %77 : vector<32x256xf32>
    %79 = vector.broadcast %8 : vector<32x1xf32> to vector<32x256xf32>
    %80 = arith.addf %78, %79 : vector<32x256xf32>
    %cst_24 = arith.constant 0.000000e+00 : f32
    %81 = vector.broadcast %cst_24 : f32 to vector<32x256xf32>
    %82 = arith.maximumf %80, %81 : vector<32x256xf32>
    %c0_25 = arith.constant 0 : index
    %c0_26 = arith.constant 0 : index
    %83 = vector.load %arg3[%c0_25, %c0_26] : memref<32x32xbf16, #tpu.memory_space<vmem>>, vector<32x32xbf16>
    %84 = arith.truncf %82 : vector<32x256xf32> to vector<32x256xbf16>
    %cst_27 = arith.constant dense<0.000000e+00> : vector<32x256xf32>
    %85 = tpu.matmul %83, %84, %cst_27 {dimension_numbers = #tpu.dot_dimension_numbers<[1], [0], [0], [1], [0, 0, 1, 1], [], []>} : vector<32x32xbf16>, vector<32x256xbf16>, vector<32x256xf32> -> vector<32x256xf32>
    %86 = vector.broadcast %9 : vector<32x1xf32> to vector<32x256xf32>
    %87 = arith.addf %85, %86 : vector<32x256xf32>
    %88 = arith.addf %87, %2 : vector<32x256xf32>
    %89 = arith.truncf %88 : vector<32x256xf32> to vector<32x256xbf16>
    %c0_28 = arith.constant 0 : index
    %c0_29 = arith.constant 0 : index
    %c0_30 = arith.constant 0 : index
    %90 = vector.load %arg5[%c0_28, %c0_29, %c0_30] : memref<1x32x256xbf16, #tpu.memory_space<vmem>>, vector<1x32x256xbf16>
    %91 = vector.shape_cast %90 : vector<1x32x256xbf16> to vector<32x256xbf16>
    %92 = vector.shape_cast %89 : vector<32x256xbf16> to vector<1x32x256xbf16>
    tpu.vector_store %arg5[%c0_28, %c0_29, %c0_30], %92 {strides = array<i32>} : memref<1x32x256xbf16, #tpu.memory_space<vmem>>, vector<1x32x256xbf16>,
    return
  }
  func.func @transform_0(%arg0: i32) -> (i32, i32, i32) {
    %c0_i32 = arith.constant 0 : i32
    %c0_i32_0 = arith.constant 0 : i32
    %c0_i32_1 = arith.constant 0 : i32
    return %arg0, %c0_i32, %c0_i32_0 : i32, i32, i32
  }
  func.func @transform_1(%arg0: i32) -> (i32, i32) {
    %c0_i32 = arith.constant 0 : i32
    %c0_i32_0 = arith.constant 0 : i32
    %c0_i32_1 = arith.constant 0 : i32
    return %c0_i32, %c0_i32_0 : i32, i32
  }
  func.func @transform_2(%arg0: i32) -> (i32, i32) {
    %c0_i32 = arith.constant 0 : i32
    %c0_i32_0 = arith.constant 0 : i32
    %c0_i32_1 = arith.constant 0 : i32
    return %c0_i32, %c0_i32_0 : i32, i32
  }
  func.func @transform_3(%arg0: i32) -> (i32, i32) {
    %c0_i32 = arith.constant 0 : i32
    %c0_i32_0 = arith.constant 0 : i32
    %c0_i32_1 = arith.constant 0 : i32
    return %c0_i32, %c0_i32_0 : i32, i32
  }
  func.func @transform_4(%arg0: i32) -> (i32, i32, i32) {
    %c0_i32 = arith.constant 0 : i32
    %c0_i32_0 = arith.constant 0 : i32
    %c0_i32_1 = arith.constant 0 : i32
    return %arg0, %c0_i32, %c0_i32_0 : i32, i32, i32
  }
  func.func @transform_5(%arg0: i32) -> (i32, i32, i32) {
    %c0_i32 = arith.constant 0 : i32
    %c0_i32_0 = arith.constant 0 : i32
    %c0_i32_1 = arith.constant 0 : i32
    return %arg0, %c0_i32, %c0_i32_0 : i32, i32, i32
  }
}

</mosaic_0001>

<llo_original>
// kernel: tpu_custom_call.1
$region0: #{tpu_custom_call.1}
  #allocation0 [shape = 'u32[]', space=smem, size = 0x4, offset = 0x4, fixed_abs, tag = 'smem constant byte address 0x4 - core index']
  #allocation1 [shape = 'u32[144,128]{1,0:T(1,128)}', space=vmem, size = 0x12000, scoped, tag = 'internal scratch']
  %s0 = inlined_call_operand.hbm [shape: bf16[2,32,256], index: 0, kind: input, shape index: {}]
  %s1 = inlined_call_operand.vmem [shape: bf16[32,32], index: 1, kind: input, shape index: {}]
  %s2 = inlined_call_operand.vmem [shape: bf16[32,32], index: 2, kind: input, shape index: {}]
  %s3 = inlined_call_operand.vmem [shape: f32[32,8], index: 3, kind: input, shape index: {}]
  %s4 = inlined_call_operand.hbm [shape: bf16[2,32,256], index: 4, kind: output, shape index: {0}]
  %s5 = inlined_call_operand.hbm [shape: f32[2,1,256], index: 5, kind: output, shape index: {1}]
  %6 = xla_tuple %s4, %s5
  %s7 = sld [smem:[#allocation0]]
  $region61: #{tpu_custom_call.1} parent=0
    _
  %s9 = ssub.s32 1, %s7
  %s10 = scalar_select 0, %s9, %s7
  $region1: #{tpu_custom_call.1} parent=0
    #allocation2 [shape = 'u8[32768]{0}', space=vmem, size = 0x8000, scoped, tag = 'input window, operand 0']
    #allocation3 [shape = 's32[2]{0}', space=sflag, size = 0x8, scoped, tag = 'scoped memory for tpu_custom_call.1']
    #allocation4 [shape = 's32[2]{0}', space=sflag, size = 0x8, scoped, tag = 'scoped memory for tpu_custom_call.1']
    #allocation5 [shape = 'u8[32768]{0}', space=vmem, size = 0x8000, scoped, tag = 'output window, operand 0']
    #allocation6 [shape = 'u8[2048]{0}', space=vmem, size = 0x800, scoped, tag = 'output window, operand 1']
    #allocation7 [shape = 's32[2]{0}', space=sflag, size = 0x8, scoped, tag = 'scoped memory for tpu_custom_call.1']
    %11 = vsyncpa [#allocation3], 0
    %s12 = scalar_lea.sflag [#allocation3], 1
    %13 = vsyncpa %s12, 0
    %14 = vsyncpa [#allocation4], 0
    %s15 = scalar_lea.sflag [#allocation4], 1
    %16 = vsyncpa %s15, 0
    %17 = vsyncpa [#allocation7], 0
    %s18 = scalar_lea.sflag [#allocation7], 1
    %19 = vsyncpa %s18, 0
    loop: start=0, step=1, limit=4
    $region2: #{tpu_custom_call.1} parent=1 // loop_pre_header
      _
    $region3: #{tpu_custom_call.1} parent=1 // loop_header
      %s21 = sphi 0, %s25
      %p22 = scmp.ge.s32.totalorder %s21, 4
      %s31 = sphi 0, %s33
      %s34 = sphi 0, %s31
      %s35 = sphi 0, %s34
      %s51 = sphi 0, %s35
      %s55 = sphi 0, %s55
      %s57 = sphi 0, %s55
      %s58 = sphi 0, %s57
      %s72 = sphi 0, %s58
      %s76 = sphi 0, %s76
      %s78 = sphi 0, %s76
      %s79 = sphi 0, %s78
      %s93 = sphi 0, %s79
      %s97 = sphi 0, %s97
      %s99 = sphi 0, %s97
      %s100 = sphi 0, %s99
      %s114 = sphi 0, %s100
      %s120 = sphi 0, %s122
      %s123 = sphi 0, %s120
      %s124 = sphi 0, %s123
      %s140 = sphi 0, %s124
      %s146 = sphi 0, %s148
      %s149 = sphi 0, %s146
      %s150 = sphi 0, %s149
      %s166 = sphi 0, %s150
    $region4: #{tpu_custom_call.1} parent=1 // loop_header_branch
      %24 = sbr.rel (%p22) target = $region8
    $region5: #{tpu_custom_call.1} parent=1 // loop_body
      %s26 = ssub.s32 %s21, 1
      %s27 = ssub.s32 %s21, 2
      %s28 = sadd.s32 %s21, 1
      %s29 = ssub.s32 %s21, %s28
      %p30 = scmp.eq.s32.totalorder %s29, 0
      %s32 = sadd.s32 %s31, 1
      %s33 = scalar_select %p30, %s31, %s32
      %p36 = pneg %p30
      %p37 = scmp.eq.s32.totalorder %s21, 1
      %p38 = por %p36, %p37
      %p39 = scmp.ne.s32.totalorder %s31, %s34
      %p40 = scmp.eq.s32.totalorder %s21, 0
      %p41 = por %p39, %p40
      %p42 = scmp.ne.s32.totalorder %s31, %s34
      %p43 = scmp.eq.s32.totalorder %s26, 1
      %p44 = por %p42, %p43
      %p45 = scmp.ne.s32.totalorder %s34, %s35
      %p46 = scmp.eq.s32.totalorder %s26, 0
      %p47 = por %p45, %p46
      %p48 = scmp.ne.s32.totalorder %s34, %s35
      %p49 = scmp.eq.s32.totalorder %s27, 1
      %p50 = por %p48, %p49
      %p52 = scmp.ne.s32.totalorder %s35, %s51
      %p53 = scmp.eq.s32.totalorder %s27, 0
      %p54 = por %p52, %p53
      %s56 = sadd.s32 %s55, 1
      %p59 = scmp.eq.s32.totalorder %s21, 1
      %p60 = scmp.ne.s32.totalorder %s55, %s57
      %p61 = scmp.eq.s32.totalorder %s21, 0
      %p62 = por %p60, %p61
      %p63 = scmp.ne.s32.totalorder %s55, %s57
      %p64 = scmp.eq.s32.totalorder %s26, 1
      %p65 = por %p63, %p64
      %p66 = scmp.ne.s32.totalorder %s57, %s58
      %p67 = scmp.eq.s32.totalorder %s26, 0
      %p68 = por %p66, %p67
      %p69 = scmp.ne.s32.totalorder %s57, %s58
      %p70 = scmp.eq.s32.totalorder %s27, 1
      %p71 = por %p69, %p70
      %p73 = scmp.ne.s32.totalorder %s58, %s72
      %p74 = scmp.eq.s32.totalorder %s27, 0
      %p75 = por %p73, %p74
      %s77 = sadd.s32 %s76, 1
      %p80 = scmp.eq.s32.totalorder %s21, 1
      %p81 = scmp.ne.s32.totalorder %s76, %s78
      %p82 = scmp.eq.s32.totalorder %s21, 0
      %p83 = por %p81, %p82
      %p84 = scmp.ne.s32.totalorder %s76, %s78
      %p85 = scmp.eq.s32.totalorder %s26, 1
      %p86 = por %p84, %p85
      %p87 = scmp.ne.s32.totalorder %s78, %s79
      %p88 = scmp.eq.s32.totalorder %s26, 0
      %p89 = por %p87, %p88
      %p90 = scmp.ne.s32.totalorder %s78, %s79
      %p91 = scmp.eq.s32.totalorder %s27, 1
      %p92 = por %p90, %p91
      %p94 = scmp.ne.s32.totalorder %s79, %s93
      %p95 = scmp.eq.s32.totalorder %s27, 0
      %p96 = por %p94, %p95
      %s98 = sadd.s32 %s97, 1
      %p101 = scmp.eq.s32.totalorder %s21, 1
      %p102 = scmp.ne.s32.totalorder %s97, %s99
      %p103 = scmp.eq.s32.totalorder %s21, 0
      %p104 = por %p102, %p103
      %p105 = scmp.ne.s32.totalorder %s97, %s99
      %p106 = scmp.eq.s32.totalorder %s26, 1
      %p107 = por %p105, %p106
      %p108 = scmp.ne.s32.totalorder %s99, %s100
      %p109 = scmp.eq.s32.totalorder %s26, 0
      %p110 = por %p108, %p109
      %p111 = scmp.ne.s32.totalorder %s99, %s100
      %p112 = scmp.eq.s32.totalorder %s27, 1
      %p113 = por %p111, %p112
      %p115 = scmp.ne.s32.totalorder %s100, %s114
      %p116 = scmp.eq.s32.totalorder %s27, 0
      %p117 = por %p115, %p116
      %s118 = ssub.s32 %s21, %s28
      %p119 = scmp.eq.s32.totalorder %s118, 0
      %s121 = sadd.s32 %s120, 1
      %s122 = scalar_select %p119, %s120, %s121
      %p125 = pneg %p119
      %p126 = scmp.eq.s32.totalorder %s21, 1
      %p127 = por %p125, %p126
      %p128 = scmp.ne.s32.totalorder %s120, %s123
      %p129 = scmp.eq.s32.totalorder %s21, 0
      %p130 = por %p128, %p129
      %p131 = scmp.ne.s32.totalorder %s120, %s123
      %p132 = scmp.eq.s32.totalorder %s26, 1
      %p133 = por %p131, %p132
      %p134 = scmp.ne.s32.totalorder %s123, %s124
      %p135 = scmp.eq.s32.totalorder %s26, 0
      %p136 = por %p134, %p135
      %p137 = scmp.ne.s32.totalorder %s123, %s124
      %p138 = scmp.eq.s32.totalorder %s27, 1
      %p139 = por %p137, %p138
      %p141 = scmp.ne.s32.totalorder %s124, %s140
      %p142 = scmp.eq.s32.totalorder %s27, 0
      %p143 = por %p141, %p142
      %s144 = ssub.s32 %s21, %s28
      %p145 = scmp.eq.s32.totalorder %s144, 0
      %s147 = sadd.s32 %s146, 1
      %s148 = scalar_select %p145, %s146, %s147
      %p151 = pneg %p145
      %p152 = scmp.eq.s32.totalorder %s21, 1
      %p153 = por %p151, %p152
      %p154 = scmp.ne.s32.totalorder %s146, %s149
      %p155 = scmp.eq.s32.totalorder %s21, 0
      %p156 = por %p154, %p155
      %p157 = scmp.ne.s32.totalorder %s146, %s149
      %p158 = scmp.eq.s32.totalorder %s26, 1
      %p159 = por %p157, %p158
      %p160 = scmp.ne.s32.totalorder %s149, %s150
      %p161 = scmp.eq.s32.totalorder %s26, 0
      %p162 = por %p160, %p161
      %p163 = scmp.ne.s32.totalorder %s149, %s150
      %p164 = scmp.eq.s32.totalorder %s27, 1
      %p165 = por %p163, %p164
      %p167 = scmp.ne.s32.totalorder %s150, %s166
      %p168 = scmp.eq.s32.totalorder %s27, 0
      %p169 = por %p167, %p168
      %p170 = scmp.le.s32.totalorder 1, %s21
      %p171 = scmp.lt.s32.totalorder %s21, 3
      %p172 = pnand %p170, %p171
      %p173 = pneg %p172
      // Predicated region
      $region9: #{tpu_custom_call.1} parent=5 // pred_check
        _
      $region10: #{tpu_custom_call.1} parent=5 // pred_check_branch
        %175 = sbr.rel (%p172) target = $region12
      $region11: #{tpu_custom_call.1} parent=5 // pred_region
        %s176 = ssub.s32 %s21, 1
        // Predicated region
        $region13: #{tpu_custom_call.1} parent=11 // pred_check
          %p177 = pneg %p68
        $region14: #{tpu_custom_call.1} parent=11 // pred_check_branch
          %179 = sbr.rel (%p177) target = $region16
        $region15: #{tpu_custom_call.1} parent=11 // pred_region
          _
        $region16: #{tpu_custom_call.1} parent=11 // pred_fallthru
          _
        // Predicated region
        $region17: #{tpu_custom_call.1} parent=11 // pred_check
          %p180 = pneg %p89
        $region18: #{tpu_custom_call.1} parent=11 // pred_check_branch
          %182 = sbr.rel (%p180) target = $region20
        $region19: #{tpu_custom_call.1} parent=11 // pred_region
          _
        $region20: #{tpu_custom_call.1} parent=11 // pred_fallthru
          _
        // Predicated region
        $region21: #{tpu_custom_call.1} parent=11 // pred_check
          %p183 = pneg %p110
        $region22: #{tpu_custom_call.1} parent=11 // pred_check_branch
          %185 = sbr.rel (%p183) target = $region24
        $region23: #{tpu_custom_call.1} parent=11 // pred_region
          _
        $region24: #{tpu_custom_call.1} parent=11 // pred_fallthru
          _
      $region12: #{tpu_custom_call.1} parent=5 // pred_fallthru
        _
      %p186 = scmp.lt.s32.totalorder %s21, 2
      // Predicated region
      $region25: #{tpu_custom_call.1} parent=5 // pred_check
        %p187 = pneg %p186
      $region26: #{tpu_custom_call.1} parent=5 // pred_check_branch
        %189 = sbr.rel (%p187) target = $region28
      $region27: #{tpu_custom_call.1} parent=5 // pred_region
        // Predicated region
        $region29: #{tpu_custom_call.1} parent=27 // pred_check
          %p190 = pneg %p41
        $region30: #{tpu_custom_call.1} parent=27 // pred_check_branch
          %192 = sbr.rel (%p190) target = $region32
        $region31: #{tpu_custom_call.1} parent=27 // pred_region
          %s193 = sand.u32 %s31, 1
          %s194 = scalar_lea.sflag [#allocation3], %s193
          %s195 = sand.u32 %s31, 1
          %s196 = smul.addr %s195, 32
          %s197 = scalar_lea.vmem [#allocation2], %s196
          %s199 = ssub.s32 512, 512
          %200 = vsyncadd %s194, %s199
          %s201 = smul.addr %s21, 8
          %s202 = smul.addr %s201, 64
          %s203 = scalar_lea.hbm %s0, %s202
          %s204 = sshll.u32 %s197, 4
          %s205 = int_to_ptr.vmem [resolvable:$true] %s204
          %210 = dma.hbm_to_vmem [thread:$0]  %s203, 512, %s205, %s194, 128, 128, 8
        $region32: #{tpu_custom_call.1} parent=27 // pred_fallthru
          _
      $region28: #{tpu_custom_call.1} parent=5 // pred_fallthru
        _
      %p211 = scmp.le.s32.totalorder 1, %s21
      %p212 = scmp.lt.s32.totalorder %s21, 3
      %p213 = pnand %p211, %p212
      %p214 = pneg %p213
      // Predicated region
      $region33: #{tpu_custom_call.1} parent=5 // pred_check
        _
      $region34: #{tpu_custom_call.1} parent=5 // pred_check_branch
        %216 = sbr.rel (%p213) target = $region36
      $region35: #{tpu_custom_call.1} parent=5 // pred_region
        %s217 = ssub.s32 %s21, 1
        %s218 = sand.u32 %s34, 1
        %s219 = scalar_lea.sflag [#allocation3], %s218
        %s220 = sand.u32 %s34, 1
        %s221 = smul.addr %s220, 32
        %s222 = scalar_lea.vmem [#allocation2], %s221
        // Predicated region
        $region37: #{tpu_custom_call.1} parent=35 // pred_check
          %p223 = pneg %p47
        $region38: #{tpu_custom_call.1} parent=35 // pred_check_branch
          %225 = sbr.rel (%p223) target = $region40
        $region39: #{tpu_custom_call.1} parent=35 // pred_region
          %226 = dma.done %s219, 512
        $region40: #{tpu_custom_call.1} parent=35 // pred_fallthru
          _
        %s227 = sand.u32 %s34, 1
        %s228 = scalar_lea.sflag [#allocation3], %s227
        %s229 = sand.u32 %s34, 1
        %s230 = smul.addr %s229, 32
        %s231 = scalar_lea.vmem [#allocation2], %s230
        %p232 = pneg %p47
        %p233 = pneg %p44
        %p234 = pneg %p68
        %p235 = pneg %p65
        %p236 = pneg %p89
        %p237 = pneg %p86
        %p238 = pneg %p110
        %p239 = pneg %p107
        %p240 = pneg %p136
        %p241 = pneg %p133
        %s242 = sand.u32 %s123, 1
        %s243 = scalar_lea.sflag [#allocation4], %s242
        %s244 = sand.u32 %s123, 1
        %s245 = smul.addr %s244, 32
        %s246 = scalar_lea.vmem [#allocation5], %s245
        %p247 = pneg %p162
        %p248 = pneg %p159
        %s249 = sand.u32 %s149, 1
        %s250 = scalar_lea.sflag [#allocation7], %s249
        %s251 = sand.u32 %s149, 1
        %s252 = smul.addr %s251, 2
        %s253 = scalar_lea.vmem [#allocation6], %s252
        %v255 = vld [vmem:[%s222] sm:$0xff]
        %v256 = vld [vmem:[%s222 + $0x8] sm:$0xff]
        %v257 = vld [vmem:[%s222 + $0x10] sm:$0xff]
        %v258 = vld [vmem:[%s222 + $0x18] sm:$0xff]
        %v259 = vunpack.c.l.bf16 %v255
        %v260 = vunpack.c.h.bf16 %v255
        %v261 = vunpack.c.l.bf16 %v256
        %v262 = vunpack.c.h.bf16 %v256
        %v263 = vunpack.c.l.bf16 %v257
        %v264 = vunpack.c.h.bf16 %v257
        %v265 = vunpack.c.l.bf16 %v258
        %v266 = vunpack.c.h.bf16 %v258
        %v267 = vld [vmem:[%s3] sm:$0xff]
        %v268 = vld [vmem:[%s3 + $0x8] sm:$0xff]
        %v269 = vld [vmem:[%s3 + $0x10] sm:$0xff]
        %v270 = vld [vmem:[%s3 + $0x18] sm:$0xff]
        %272 = vset.pattern.permute.xlu0 6
        %273 = vperm.xlu0 %272, %v267
        %v274 = vpop.permute.xlu0 %273
        %277 = vset.pattern.permute.xlu0 6
        %278 = vperm.xlu0 %277, %v268
        %v279 = vpop.permute.xlu0 %278
        %282 = vset.pattern.permute.xlu0 6
        %283 = vperm.xlu0 %282, %v269
        %v284 = vpop.permute.xlu0 %283
        %287 = vset.pattern.permute.xlu0 6
        %288 = vperm.xlu0 %287, %v270
        %v289 = vpop.permute.xlu0 %288
        %v291 = vmul.f32 %v259, %v274
        %v292 = vmul.f32 %v260, %v274
        %v293 = vmul.f32 %v261, %v279
        %v294 = vmul.f32 %v262, %v279
        %v295 = vmul.f32 %v263, %v284
        %v296 = vmul.f32 %v264, %v284
        %v297 = vmul.f32 %v265, %v289
        %v298 = vmul.f32 %v266, %v289
        %v299 = vadd.f32 %v291, %v293
        %v300 = vadd.f32 %v299, %v295
        %v301 = vadd.f32 %v300, %v297
        %v302 = vrot.slane %v301, 4
        %v303 = vadd.f32 %v301, %v302
        %v304 = vrot.slane %v303, 2
        %v305 = vadd.f32 %v303, %v304
        %v306 = vrot.slane %v305, 1
        %v307 = vadd.f32 %v305, %v306
        %v308 = vadd.f32 %v292, %v294
        %v309 = vadd.f32 %v308, %v296
        %v310 = vadd.f32 %v309, %v298
        %v311 = vrot.slane %v310, 4
        %v312 = vadd.f32 %v310, %v311
        %v313 = vrot.slane %v312, 2
        %v314 = vadd.f32 %v312, %v313
        %v315 = vrot.slane %v314, 1
        %v316 = vadd.f32 %v314, %v315
        %317 = vset.pattern.permute.xlu0 7
        %318 = vperm.xlu0 %317, %v267
        %v319 = vpop.permute.xlu0 %318
        %v321 = vadd.f32 %v307, %v319
        %v322 = vadd.f32 %v316, %v319
        %v323 = vxor.u32 %v321, 2147483648
        %v324 = vxor.u32 %v322, 2147483648
        %v325 = vmul.f32 %v323, 1.442695
        %v326 = vpow.pop %v325
        %v327 = vmul.f32 %v324, 1.442695
        %v328 = vpow.pop %v327
        %v329 = vadd.f32 %v326, 1.0
        %v330 = vadd.f32 %v328, 1.0
        %v331 = vrcp.pop %v329
        %v332 = vmul.f32 1.0, %v331
        %v333 = vrcp.pop %v330
        %v334 = vmul.f32 1.0, %v333
        %v337 = vcombine.low %v332, %v334
        %v339 = vunpack.c.l.s4 1966171168
        %v340 = vunpack.c.0.s8 %v339
        %v341 = vlaneseq
        %v342 = vshrl.u32 %v341, 7
        %v343 = vsub.s32 %v340, %v342
        %v344 = vrot.slane %v337, %v343
        %v346 = vunpack.c.l.s4 1966171168
        %v347 = vunpack.c.0.s8 %v346
        %v348 = vlaneseq
        %v349 = vshrl.u32 %v348, 7
        %v350 = vsub.s32 %v347, %v349
        %v351 = vrot.slane %v344, %v350
        %v353 = vlaneseq
        %vm354 = vcmp.ge.s32.totalorder %v353, 0
        %vm355 = vcmp.lt.s32.totalorder %v353, 256
        %vm356 = vmand %vm354, %vm355
        %357 = vst.msk [vmem:[%s253] sm:$0x3] %vm356, %v351
        %v358 = vadd.f32 %v259, %v260
        %359 = vadd.xlane.f32.xlu0 %v358
        %v360 = vpop.xlane.xlu0 %359
        %v361 = vadd.f32 %v261, %v262
        %362 = vadd.xlane.f32.xlu0 %v361
        %v363 = vpop.xlane.xlu0 %362
        %v364 = vadd.f32 %v263, %v264
        %365 = vadd.xlane.f32.xlu0 %v364
        %v366 = vpop.xlane.xlu0 %365
        %v367 = vadd.f32 %v265, %v266
        %368 = vadd.xlane.f32.xlu0 %v367
        %v369 = vpop.xlane.xlu0 %368
        %v370 = vrcp.pop 256.0
        %v371 = vmul.f32 %v360, %v370
        %v372 = vmul.f32 %v363, %v370
        %v373 = vmul.f32 %v366, %v370
        %v374 = vmul.f32 %v369, %v370
        %v375 = vmul.f32 %v259, %v259
        %v376 = vmul.f32 %v260, %v260
        %v377 = vmul.f32 %v261, %v261
        %v378 = vmul.f32 %v262, %v262
        %v379 = vmul.f32 %v263, %v263
        %v380 = vmul.f32 %v264, %v264
        %v381 = vmul.f32 %v265, %v265
        %v382 = vmul.f32 %v266, %v266
        %v383 = vadd.f32 %v375, %v376
        %384 = vadd.xlane.f32.xlu0 %v383
        %v385 = vpop.xlane.xlu0 %384
        %v386 = vadd.f32 %v377, %v378
        %387 = vadd.xlane.f32.xlu0 %v386
        %v388 = vpop.xlane.xlu0 %387
        %v389 = vadd.f32 %v379, %v380
        %390 = vadd.xlane.f32.xlu0 %v389
        %v391 = vpop.xlane.xlu0 %390
        %v392 = vadd.f32 %v381, %v382
        %393 = vadd.xlane.f32.xlu0 %v392
        %v394 = vpop.xlane.xlu0 %393
        %v395 = vmul.f32 %v385, %v370
        %v396 = vmul.f32 %v388, %v370
        %v397 = vmul.f32 %v391, %v370
        %v398 = vmul.f32 %v394, %v370
        %v399 = vmul.f32 %v371, %v371
        %v400 = vmul.f32 %v372, %v372
        %v401 = vmul.f32 %v373, %v373
        %v402 = vmul.f32 %v374, %v374
        %v403 = vsub.f32 %v395, %v399
        %v404 = vsub.f32 %v396, %v400
        %v405 = vsub.f32 %v397, %v401
        %v406 = vsub.f32 %v398, %v402
        %v407 = vmax.f32 %v403, 0.0
        %v408 = vmax.f32 %v404, 0.0
        %v409 = vmax.f32 %v405, 0.0
        %v410 = vmax.f32 %v406, 0.0
        %v411 = vsub.f32 %v259, %v371
        %v412 = vsub.f32 %v260, %v371
        %v413 = vsub.f32 %v261, %v372
        %v414 = vsub.f32 %v262, %v372
        %v415 = vsub.f32 %v263, %v373
        %v416 = vsub.f32 %v264, %v373
        %v417 = vsub.f32 %v265, %v374
        %v418 = vsub.f32 %v266, %v374
        %v419 = vadd.f32 %v407, 0.001
        %v420 = vadd.f32 %v408, 0.001
        %v421 = vadd.f32 %v409, 0.001
        %v422 = vadd.f32 %v410, 0.001
        %v423 = vrsqrt.pop %v419
        %v424 = vrsqrt.pop %v420
        %v425 = vrsqrt.pop %v421
        %v426 = vrsqrt.pop %v422
        %v427 = vmul.f32 %v411, %v423
        %v428 = vmul.f32 %v412, %v423
        %v429 = vmul.f32 %v413, %v424
        %v430 = vmul.f32 %v414, %v424
        %v431 = vmul.f32 %v415, %v425
        %v432 = vmul.f32 %v416, %v425
        %v433 = vmul.f32 %v417, %v426
        %v434 = vmul.f32 %v418, %v426
        %435 = vset.pattern.permute.xlu0 0
        %436 = vperm.xlu0 %435, %v267
        %v437 = vpop.permute.xlu0 %436
        %439 = vset.pattern.permute.xlu0 0
        %440 = vperm.xlu0 %439, %v268
        %v441 = vpop.permute.xlu0 %440
        %443 = vset.pattern.permute.xlu0 0
        %444 = vperm.xlu0 %443, %v269
        %v445 = vpop.permute.xlu0 %444
        %447 = vset.pattern.permute.xlu0 0
        %448 = vperm.xlu0 %447, %v270
        %v449 = vpop.permute.xlu0 %448
        %v451 = vmul.f32 %v427, %v437
        %v452 = vmul.f32 %v428, %v437
        %v453 = vmul.f32 %v429, %v441
        %v454 = vmul.f32 %v430, %v441
        %v455 = vmul.f32 %v431, %v445
        %v456 = vmul.f32 %v432, %v445
        %v457 = vmul.f32 %v433, %v449
        %v458 = vmul.f32 %v434, %v449
        %459 = vset.pattern.permute.xlu0 1
        %460 = vperm.xlu0 %459, %v267
        %v461 = vpop.permute.xlu0 %460
        %463 = vset.pattern.permute.xlu0 1
        %464 = vperm.xlu0 %463, %v268
        %v465 = vpop.permute.xlu0 %464
        %467 = vset.pattern.permute.xlu0 1
        %468 = vperm.xlu0 %467, %v269
        %v469 = vpop.permute.xlu0 %468
        %471 = vset.pattern.permute.xlu0 1
        %472 = vperm.xlu0 %471, %v270
        %v473 = vpop.permute.xlu0 %472
        %v475 = vadd.f32 %v451, %v461
        %v476 = vadd.f32 %v452, %v461
        %v477 = vadd.f32 %v453, %v465
        %v478 = vadd.f32 %v454, %v465
        %v479 = vadd.f32 %v455, %v469
        %v480 = vadd.f32 %v456, %v469
        %v481 = vadd.f32 %v457, %v473
        %v482 = vadd.f32 %v458, %v473
        %v483 = vmax.f32 %v475, 0.0
        %v484 = vmax.f32 %v476, 0.0
        %v485 = vmax.f32 %v477, 0.0
        %v486 = vmax.f32 %v478, 0.0
        %v487 = vmax.f32 %v479, 0.0
        %v488 = vmax.f32 %v480, 0.0
        %v489 = vmax.f32 %v481, 0.0
        %v490 = vmax.f32 %v482, 0.0
        %v491 = vld [vmem:[%s1] sm:$0xf]
        %v492 = vld [vmem:[%s1 + $0x4] sm:$0xf]
        %v493 = vld [vmem:[%s1 + $0x8] sm:$0xf]
        %v494 = vld [vmem:[%s1 + $0xc] sm:$0xf]
        %v495 = vpack.c.bf16 %v485, %v483
        %v496 = vpack.c.bf16 %v486, %v484
        %v497 = vpack.c.bf16 %v489, %v487
        %v498 = vpack.c.bf16 %v490, %v488
        %499 = vset.pattern.permute.xlu0 2
        %500 = vperm.xlu0 %499, %v267
        %v501 = vpop.permute.xlu0 %500
        %503 = vset.pattern.permute.xlu0 2
        %504 = vperm.xlu0 %503, %v268
        %v505 = vpop.permute.xlu0 %504
        %507 = vset.pattern.permute.xlu0 2
        %508 = vperm.xlu0 %507, %v269
        %v509 = vpop.permute.xlu0 %508
        %511 = vset.pattern.permute.xlu0 2
        %512 = vperm.xlu0 %511, %v270
        %v513 = vpop.permute.xlu0 %512
        %v519 = vunpack.c.l.b16 %v491
        %v520 = vunpack.c.l.b16 %v492
        %v521 = vunpack.c.l.b16 %v493
        %v522 = vunpack.c.l.b16 %v494
        %v523 = vpack.c.b16 %v520, %v519
        %v524 = vpack.c.b16 %v522, %v521
        %vm525 = vcmask 261120
        %v527 = vsel %vm525, %v523, 0
        %v530 = vsel %vm525, %v524, 0
        %532 = vmatprep.subr.bf16.mxu0 0
        %533 = vmatpush1.bf16.msra.mxu0 0
        %534 = vmatprep.subr.bf16.mxu0 0
        %535 = vmatpush1.bf16.msra.mxu0 0
        %536 = vmatprep.subr.bf16.mxu0 0
        %537 = vmatpush1.bf16.msra.mxu0 0
        %538 = vmatprep.subr.bf16.mxu0 0
        %539 = vmatpush1.bf16.msra.mxu0 0
        %540 = vmatprep.subr.bf16.mxu0 0
        %541 = vmatpush1.bf16.msra.mxu0 0
        %542 = vmatprep.subr.bf16.mxu0 0
        %543 = vmatpush1.bf16.msra.mxu0 0
        %544 = vmatprep.subr.bf16.mxu0 %v498
        %545 = vmatpush1.bf16.msra.mxu0 %v497
        %546 = vmatprep.subr.bf16.mxu0 %v496
        %547 = vmatpush1.bf16.msra.mxu0 %v495
        %548 = vmatprep.subr.bf16.mxu0 0
        %549 = vmatpush2.bf16.msra.mxu0 0
        %550 = vmatprep.subr.bf16.mxu0 0
        %551 = vmatpush2.bf16.msra.mxu0 0
        %552 = vmatprep.subr.bf16.mxu0 0
        %553 = vmatpush2.bf16.msra.mxu0 0
        %554 = vmatprep.subr.bf16.mxu0 0
        %555 = vmatpush2.bf16.msra.mxu0 0
        %556 = vmatprep.subr.bf16.mxu0 0
        %557 = vmatpush2.bf16.msra.mxu0 0
        %558 = vmatprep.subr.bf16.mxu0 0
        %559 = vmatpush2.bf16.msra.mxu0 0
        %560 = vmatprep.subr.bf16.mxu0 0
        %561 = vmatpush2.bf16.msra.mxu0 0
        %562 = vmatprep.subr.bf16.mxu0 0
        %563 = vmatpush2.bf16.msra.mxu0 0
        %564 = vmatprep.mubr.bf16.mxu0 0
        %565 = vmatmul.mubr.bf16.gmra.mxu0 %v527
        %v566 = vpop.f32.mrf.mxu0
        %v567 = vadd.f32 %v501, %v566
        %v568 = vpop.f32.mrf.mxu0
        %v569 = vadd.f32 %v501, %v568
        %v570 = vpop.f32.mrf.mxu0
        %v571 = vadd.f32 %v505, %v570
        %v572 = vpop.f32.mrf.mxu0
        %v573 = vadd.f32 %v505, %v572
        %574 = vmatprep.mubr.bf16.mxu0 0
        %575 = vmatmul.mubr.bf16.gmra.mxu0 %v530
        %v576 = vpop.f32.mrf.mxu0
        %v577 = vadd.f32 %v509, %v576
        %v578 = vpop.f32.mrf.mxu0
        %v579 = vadd.f32 %v509, %v578
        %v580 = vpop.f32.mrf.mxu0
        %v581 = vadd.f32 %v513, %v580
        %v582 = vpop.f32.mrf.mxu0
        %v583 = vadd.f32 %v513, %v582
        %584 = vdwg.mxu0
        %v585 = vadd.f32 %v567, %v569
        %586 = vadd.xlane.f32.xlu0 %v585
        %v587 = vpop.xlane.xlu0 %586
        %v588 = vadd.f32 %v571, %v573
        %589 = vadd.xlane.f32.xlu0 %v588
        %v590 = vpop.xlane.xlu0 %589
        %v591 = vadd.f32 %v577, %v579
        %592 = vadd.xlane.f32.xlu0 %v591
        %v593 = vpop.xlane.xlu0 %592
        %v594 = vadd.f32 %v581, %v583
        %595 = vadd.xlane.f32.xlu0 %v594
        %v596 = vpop.xlane.xlu0 %595
        %v597 = vmul.f32 %v587, %v370
        %v598 = vmul.f32 %v590, %v370
        %v599 = vmul.f32 %v593, %v370
        %v600 = vmul.f32 %v596, %v370
        %v601 = vmul.f32 %v567, %v567
        %v602 = vmul.f32 %v569, %v569
        %v603 = vmul.f32 %v571, %v571
        %v604 = vmul.f32 %v573, %v573
        %v605 = vmul.f32 %v577, %v577
        %v606 = vmul.f32 %v579, %v579
        %v607 = vmul.f32 %v581, %v581
        %v608 = vmul.f32 %v583, %v583
        %v609 = vadd.f32 %v601, %v602
        %610 = vadd.xlane.f32.xlu0 %v609
        %v611 = vpop.xlane.xlu0 %610
        %v612 = vadd.f32 %v603, %v604
        %613 = vadd.xlane.f32.xlu0 %v612
        %v614 = vpop.xlane.xlu0 %613
        %v615 = vadd.f32 %v605, %v606
        %616 = vadd.xlane.f32.xlu0 %v615
        %v617 = vpop.xlane.xlu0 %616
        %v618 = vadd.f32 %v607, %v608
        %619 = vadd.xlane.f32.xlu0 %v618
        %v620 = vpop.xlane.xlu0 %619
        %v621 = vmul.f32 %v611, %v370
        %v622 = vmul.f32 %v614, %v370
        %v623 = vmul.f32 %v617, %v370
        %v624 = vmul.f32 %v620, %v370
        %v625 = vmul.f32 %v597, %v597
        %v626 = vmul.f32 %v598, %v598
        %v627 = vmul.f32 %v599, %v599
        %v628 = vmul.f32 %v600, %v600
        %v629 = vsub.f32 %v621, %v625
        %v630 = vsub.f32 %v622, %v626
        %v631 = vsub.f32 %v623, %v627
        %v632 = vsub.f32 %v624, %v628
        %v633 = vmax.f32 %v629, 0.0
        %v634 = vmax.f32 %v630, 0.0
        %v635 = vmax.f32 %v631, 0.0
        %v636 = vmax.f32 %v632, 0.0
        %v637 = vsub.f32 %v567, %v597
        %v638 = vsub.f32 %v569, %v597
        %v639 = vsub.f32 %v571, %v598
        %v640 = vsub.f32 %v573, %v598
        %v641 = vsub.f32 %v577, %v599
        %v642 = vsub.f32 %v579, %v599
        %v643 = vsub.f32 %v581, %v600
        %v644 = vsub.f32 %v583, %v600
        %v645 = vadd.f32 %v633, 0.001
        %v646 = vadd.f32 %v634, 0.001
        %v647 = vadd.f32 %v635, 0.001
        %v648 = vadd.f32 %v636, 0.001
        %v649 = vrsqrt.pop %v645
        %v650 = vrsqrt.pop %v646
        %v651 = vrsqrt.pop %v647
        %v652 = vrsqrt.pop %v648
        %v653 = vmul.f32 %v637, %v649
        %v654 = vmul.f32 %v638, %v649
        %v655 = vmul.f32 %v639, %v650
        %v656 = vmul.f32 %v640, %v650
        %v657 = vmul.f32 %v641, %v651
        %v658 = vmul.f32 %v642, %v651
        %v659 = vmul.f32 %v643, %v652
        %v660 = vmul.f32 %v644, %v652
        %661 = vset.pattern.permute.xlu0 3
        %662 = vperm.xlu0 %661, %v267
        %v663 = vpop.permute.xlu0 %662
        %665 = vset.pattern.permute.xlu0 3
        %666 = vperm.xlu0 %665, %v268
        %v667 = vpop.permute.xlu0 %666
        %669 = vset.pattern.permute.xlu0 3
        %670 = vperm.xlu0 %669, %v269
        %v671 = vpop.permute.xlu0 %670
        %673 = vset.pattern.permute.xlu0 3
        %674 = vperm.xlu0 %673, %v270
        %v675 = vpop.permute.xlu0 %674
        %v677 = vmul.f32 %v653, %v663
        %v678 = vmul.f32 %v654, %v663
        %v679 = vmul.f32 %v655, %v667
        %v680 = vmul.f32 %v656, %v667
        %v681 = vmul.f32 %v657, %v671
        %v682 = vmul.f32 %v658, %v671
        %v683 = vmul.f32 %v659, %v675
        %v684 = vmul.f32 %v660, %v675
        %685 = vset.pattern.permute.xlu0 4
        %686 = vperm.xlu0 %685, %v267
        %v687 = vpop.permute.xlu0 %686
        %689 = vset.pattern.permute.xlu0 4
        %690 = vperm.xlu0 %689, %v268
        %v691 = vpop.permute.xlu0 %690
        %693 = vset.pattern.permute.xlu0 4
        %694 = vperm.xlu0 %693, %v269
        %v695 = vpop.permute.xlu0 %694
        %697 = vset.pattern.permute.xlu0 4
        %698 = vperm.xlu0 %697, %v270
        %v699 = vpop.permute.xlu0 %698
        %v701 = vadd.f32 %v677, %v687
        %v702 = vadd.f32 %v678, %v687
        %v703 = vadd.f32 %v679, %v691
        %v704 = vadd.f32 %v680, %v691
        %v705 = vadd.f32 %v681, %v695
        %v706 = vadd.f32 %v682, %v695
        %v707 = vadd.f32 %v683, %v699
        %v708 = vadd.f32 %v684, %v699
        %v709 = vmax.f32 %v701, 0.0
        %v710 = vmax.f32 %v702, 0.0
        %v711 = vmax.f32 %v703, 0.0
        %v712 = vmax.f32 %v704, 0.0
        %v713 = vmax.f32 %v705, 0.0
        %v714 = vmax.f32 %v706, 0.0
        %v715 = vmax.f32 %v707, 0.0
        %v716 = vmax.f32 %v708, 0.0
        %v717 = vld [vmem:[%s2] sm:$0xf]
        %v718 = vld [vmem:[%s2 + $0x4] sm:$0xf]
        %v719 = vld [vmem:[%s2 + $0x8] sm:$0xf]
        %v720 = vld [vmem:[%s2 + $0xc] sm:$0xf]
        %v721 = vpack.c.bf16 %v711, %v709
        %v722 = vpack.c.bf16 %v712, %v710
        %v723 = vpack.c.bf16 %v715, %v713
        %v724 = vpack.c.bf16 %v716, %v714
        %725 = vset.pattern.permute.xlu0 5
        %726 = vperm.xlu0 %725, %v267
        %v727 = vpop.permute.xlu0 %726
        %729 = vset.pattern.permute.xlu0 5
        %730 = vperm.xlu0 %729, %v268
        %v731 = vpop.permute.xlu0 %730
        %733 = vset.pattern.permute.xlu0 5
        %734 = vperm.xlu0 %733, %v269
        %v735 = vpop.permute.xlu0 %734
        %737 = vset.pattern.permute.xlu0 5
        %738 = vperm.xlu0 %737, %v270
        %v739 = vpop.permute.xlu0 %738
        %v745 = vunpack.c.l.b16 %v717
        %v746 = vunpack.c.l.b16 %v718
        %v747 = vunpack.c.l.b16 %v719
        %v748 = vunpack.c.l.b16 %v720
        %v749 = vpack.c.b16 %v746, %v745
        %v750 = vpack.c.b16 %v748, %v747
        %v752 = vsel %vm525, %v749, 0
        %v755 = vsel %vm525, %v750, 0
        %757 = vmatprep.subr.bf16.mxu0 0
        %758 = vmatpush1.bf16.msra.mxu0 0
        %759 = vmatprep.subr.bf16.mxu0 0
        %760 = vmatpush1.bf16.msra.mxu0 0
        %761 = vmatprep.subr.bf16.mxu0 0
        %762 = vmatpush1.bf16.msra.mxu0 0
        %763 = vmatprep.subr.bf16.mxu0 0
        %764 = vmatpush1.bf16.msra.mxu0 0
        %765 = vmatprep.subr.bf16.mxu0 0
        %766 = vmatpush1.bf16.msra.mxu0 0
        %767 = vmatprep.subr.bf16.mxu0 0
        %768 = vmatpush1.bf16.msra.mxu0 0
        %769 = vmatprep.subr.bf16.mxu0 %v724
        %770 = vmatpush1.bf16.msra.mxu0 %v723
        %771 = vmatprep.subr.bf16.mxu0 %v722
        %772 = vmatpush1.bf16.msra.mxu0 %v721
        %773 = vmatprep.subr.bf16.mxu0 0
        %774 = vmatpush2.bf16.msra.mxu0 0
        %775 = vmatprep.subr.bf16.mxu0 0
        %776 = vmatpush2.bf16.msra.mxu0 0
        %777 = vmatprep.subr.bf16.mxu0 0
        %778 = vmatpush2.bf16.msra.mxu0 0
        %779 = vmatprep.subr.bf16.mxu0 0
        %780 = vmatpush2.bf16.msra.mxu0 0
        %781 = vmatprep.subr.bf16.mxu0 0
        %782 = vmatpush2.bf16.msra.mxu0 0
        %783 = vmatprep.subr.bf16.mxu0 0
        %784 = vmatpush2.bf16.msra.mxu0 0
        %785 = vmatprep.subr.bf16.mxu0 0
        %786 = vmatpush2.bf16.msra.mxu0 0
        %787 = vmatprep.subr.bf16.mxu0 0
        %788 = vmatpush2.bf16.msra.mxu0 0
        %789 = vmatprep.mubr.bf16.mxu0 0
        %790 = vmatmul.mubr.bf16.gmra.mxu0 %v752
        %v791 = vpop.f32.mrf.mxu0
        %v792 = vadd.f32 %v727, %v791
        %v793 = vpop.f32.mrf.mxu0
        %v794 = vadd.f32 %v727, %v793
        %v795 = vpop.f32.mrf.mxu0
        %v796 = vadd.f32 %v731, %v795
        %v797 = vpop.f32.mrf.mxu0
        %v798 = vadd.f32 %v731, %v797
        %799 = vmatprep.mubr.bf16.mxu0 0
        %800 = vmatmul.mubr.bf16.gmra.mxu0 %v755
        %v801 = vpop.f32.mrf.mxu0
        %v802 = vadd.f32 %v735, %v801
        %v803 = vpop.f32.mrf.mxu0
        %v804 = vadd.f32 %v735, %v803
        %v805 = vpop.f32.mrf.mxu0
        %v806 = vadd.f32 %v739, %v805
        %v807 = vpop.f32.mrf.mxu0
        %v808 = vadd.f32 %v739, %v807
        %809 = vdwg.mxu0
        %v810 = vadd.f32 %v792, %v259
        %v811 = vadd.f32 %v794, %v260
        %v812 = vadd.f32 %v796, %v261
        %v813 = vadd.f32 %v798, %v262
        %v814 = vadd.f32 %v802, %v263
        %v815 = vadd.f32 %v804, %v264
        %v816 = vadd.f32 %v806, %v265
        %v817 = vadd.f32 %v808, %v266
        %v818 = vpack.c.bf16 %v812, %v810
        %v819 = vpack.c.bf16 %v813, %v811
        %v820 = vpack.c.bf16 %v816, %v814
        %v821 = vpack.c.bf16 %v817, %v815
        %v826 = vunpack.c.l.b16 %v818
        %v827 = vunpack.c.l.b16 %v819
        %v828 = vunpack.c.h.b16 %v818
        %v829 = vunpack.c.h.b16 %v819
        %v830 = vunpack.c.l.b16 %v820
        %v831 = vunpack.c.l.b16 %v821
        %v832 = vunpack.c.h.b16 %v820
        %v833 = vunpack.c.h.b16 %v821
        %v834 = vpack.c.b16 %v827, %v826
        %v835 = vpack.c.b16 %v829, %v828
        %v836 = vpack.c.b16 %v831, %v830
        %v837 = vpack.c.b16 %v833, %v832
        %842 = vst [vmem:[%s246] sm:$0xff] %v834
        %843 = vst [vmem:[%s246 + $0x8] sm:$0xff] %v835
        %844 = vst [vmem:[%s246 + $0x10] sm:$0xff] %v836
        %845 = vst [vmem:[%s246 + $0x18] sm:$0xff] %v837
        %s846 = sand.u32 %s123, 1
        %s847 = scalar_lea.sflag [#allocation4], %s846
        %s848 = sand.u32 %s123, 1
        %s849 = smul.addr %s848, 32
        %s850 = scalar_lea.vmem [#allocation5], %s849
        %s851 = sand.u32 %s149, 1
        %s852 = scalar_lea.sflag [#allocation7], %s851
        %s853 = sand.u32 %s149, 1
        %s854 = smul.addr %s853, 2
        %s855 = scalar_lea.vmem [#allocation6], %s854
        // Predicated region
        $region41: #{tpu_custom_call.1} parent=35 // pred_check
          %p856 = pneg %p133
        $region42: #{tpu_custom_call.1} parent=35 // pred_check_branch
          %858 = sbr.rel (%p856) target = $region44
        $region43: #{tpu_custom_call.1} parent=35 // pred_region
          %s860 = ssub.s32 512, 512
          %861 = vsyncadd %s847, %s860
          %s862 = smul.addr %s26, 8
          %s863 = smul.addr %s862, 64
          %s864 = scalar_lea.hbm %s4, %s863
          %s865 = sshll.u32 %s850, 4
          %s866 = int_to_ptr.vmem [resolvable:$true] %s865
          %871 = dma.vmem_to_hbm [thread:$0]  %s866, 512, %s864, %s847, 128, 128, 8
        $region44: #{tpu_custom_call.1} parent=35 // pred_fallthru
          _
        // Predicated region
        $region45: #{tpu_custom_call.1} parent=35 // pred_check
          %p872 = pneg %p159
        $region46: #{tpu_custom_call.1} parent=35 // pred_check_branch
          %874 = sbr.rel (%p872) target = $region48
        $region47: #{tpu_custom_call.1} parent=35 // pred_region
          %s876 = ssub.s32 32, 32
          %877 = vsyncadd %s852, %s876
          %s878 = smul.addr %s26, 2
          %s879 = smul.addr %s878, 16
          %s880 = scalar_lea.hbm %s5, %s879
          %s882 = sshll.u32 %s855, 4
          %s883 = int_to_ptr.vmem [resolvable:$true] %s882
          %885 = dma.vmem_to_hbm [thread:$0]  %s883, 32, %s880, %s852
        $region48: #{tpu_custom_call.1} parent=35 // pred_fallthru
          _
      $region36: #{tpu_custom_call.1} parent=5 // pred_fallthru
        _
      %p886 = scmp.le.s32.totalorder 2, %s21
      // Predicated region
      $region49: #{tpu_custom_call.1} parent=5 // pred_check
        %p887 = pneg %p886
      $region50: #{tpu_custom_call.1} parent=5 // pred_check_branch
        %889 = sbr.rel (%p887) target = $region52
      $region51: #{tpu_custom_call.1} parent=5 // pred_region
        %s890 = ssub.s32 %s21, 2
        // Predicated region
        $region53: #{tpu_custom_call.1} parent=51 // pred_check
          %p891 = pneg %p139
        $region54: #{tpu_custom_call.1} parent=51 // pred_check_branch
          %893 = sbr.rel (%p891) target = $region56
        $region55: #{tpu_custom_call.1} parent=51 // pred_region
          %s894 = sand.u32 %s124, 1
          %s895 = scalar_lea.sflag [#allocation4], %s894
          %s896 = sand.u32 %s124, 1
          %s897 = smul.addr %s896, 32
          %s898 = scalar_lea.vmem [#allocation5], %s897
          %899 = dma.done %s895, 512
        $region56: #{tpu_custom_call.1} parent=51 // pred_fallthru
          _
        // Predicated region
        $region57: #{tpu_custom_call.1} parent=51 // pred_check
          %p900 = pneg %p165
        $region58: #{tpu_custom_call.1} parent=51 // pred_check_branch
          %902 = sbr.rel (%p900) target = $region60
        $region59: #{tpu_custom_call.1} parent=51 // pred_region
          %s903 = sand.u32 %s150, 1
          %s904 = scalar_lea.sflag [#allocation7], %s903
          %s905 = sand.u32 %s150, 1
          %s906 = smul.addr %s905, 2
          %s907 = scalar_lea.vmem [#allocation6], %s906
          %908 = dma.done %s904, 32
        $region60: #{tpu_custom_call.1} parent=51 // pred_fallthru
          _
      $region52: #{tpu_custom_call.1} parent=5 // pred_fallthru
        _
    $region6: #{tpu_custom_call.1} parent=1 // loop_footer
      %s25 = sadd.s32 1, %s21
    $region7: #{tpu_custom_call.1} parent=1 // loop_footer_branch
      %20 = sbr.rel target = $region3
    $region8: #{tpu_custom_call.1} parent=1 // loop_exit
      _
    %909 = vsyncpa [#allocation3], 1
    %s910 = scalar_lea.sflag [#allocation3], 1
    %911 = vsyncpa %s910, 1
    %912 = vsyncpa [#allocation4], 1
    %s913 = scalar_lea.sflag [#allocation4], 1
    %914 = vsyncpa %s913, 1
    %915 = vsyncpa [#allocation7], 1
    %s916 = scalar_lea.sflag [#allocation7], 1
    %917 = vsyncpa %s916, 1

</llo_original>
